<compile_context>
chip_gen: v7x
topology: tpu7x:2x2x1
jax: 0.10.0
libtpu: 0.0.40
codegen_flags: <defaults>
</compile_context>

<pallas_src>
import math

import jax
import jax.numpy as jnp
from jax.experimental import pallas as pl
from jax.experimental.pallas import tpu as pltpu


# ---------------------------------------------------------------------------
# Kernel 1: DO-Conv weight composition (einsum 'cms,ois->oim').
# Because c and s are both contracted, it factorizes into a single matmul:
#   w_ref : (O * I_g, D_mul)   flattened W (row-major == torch reshape order)
#   d_ref : (D_mul, M*N)       pre-transposed channel-summed D_eff
#   o_ref : (O * I_g, M*N)
# One grid step; full arrays fit VMEM trivially.
# ---------------------------------------------------------------------------
def _compose_kernel(w_ref, d_ref, o_ref):
    o_ref[...] = jnp.dot(w_ref[...], d_ref[...],
                         preferred_element_type=jnp.float32)


def compose_dow(W, D, d_diag, out_channels, in_per_group, M, N):
    """W: (out_channels, in_channels//groups, D_mul); D, d_diag: (in_channels, M*N, D_mul)."""
    D_mul = W.shape[-1]
    MN = M * N
    # sum over c (plain-JAX glue, negligible FLOPs), pre-transposed for the MXU
    dsum_t = jnp.sum(D + d_diag, axis=0).T            # (D_mul, MN)
    w_flat = W.reshape(-1, D_mul)                     # (O * I_g, D_mul)

    dow = pl.pallas_call(
        _compose_kernel,
        out_shape=jax.ShapeDtypeStruct((w_flat.shape[0], MN), jnp.float32),
    )(w_flat, dsum_t)

    # row-major flat (o, i) order is preserved by torch's reshapes, so this is
    # exactly torch.reshape(einsum(...), (O, I_g, M, N)).
    return dow.reshape(out_channels, in_per_group, M, N)


# ---------------------------------------------------------------------------
# Kernel 2: conv-as-matmul over im2col columns, K-tiled with f32 accumulator.
#   w_ref : (OC, TK)   bf16
#   x_ref : (TK, TP)   bf16  one tile of im2col columns for one batch element
#   b_ref : (OC, 1)    f32
#   o_ref : (OC, TP)   f32
#   acc   : (OC, TP)   f32 VMEM scratch
# ---------------------------------------------------------------------------
def _conv_mm_kernel(w_ref, x_ref, b_ref, o_ref, acc_ref):
    @pl.when(pl.program_id(2) == 0)
    def _():
        acc_ref[...] = jnp.zeros_like(acc_ref)

    acc_ref[...] += jnp.dot(w_ref[...], x_ref[...],
                            preferred_element_type=jnp.float32)

    @pl.when(pl.program_id(2) == pl.num_programs(2) - 1)
    def _():
        o_ref[...] = (acc_ref[...] + b_ref[...]).astype(o_ref.dtype)


def conv2d_pallas(x, w, bias, stride, padding, dilation, groups):
    # TODO(synk): grouped conv (DO-DConv / DO-GConv, groups > 1) and non-'zeros'
    #             padding modes are not implemented in this kernel path.
    assert groups == 1, "only groups=1 (DO-Conv) supported in this kernel"
    B, C, H, Wd = x.shape
    OC, IC, KH, KW = w.shape
    sh, sw = stride
    ph, pw = padding
    dh, dw = dilation
    OH = (H + 2 * ph - dh * (KH - 1) - 1) // sh + 1
    OW = (Wd + 2 * pw - dw * (KW - 1) - 1) // sw + 1

    # ---- im2col in bf16 (plain-JAX glue) -> (B, C*KH*KW, OH*OW) ----
    # TODO(synk): fully fusing im2col into the kernel (halo-tile DMA per output
    #             row tile) would remove the KH*KW HBM blowup entirely; bf16
    #             columns halve the traffic for now.
    xb = x.astype(jnp.bfloat16)
    xp = jnp.pad(xb, ((0, 0), (0, 0), (ph, ph), (pw, pw)))
    cols = []
    for i in range(KH):
        for j in range(KW):
            cols.append(
                xp[:, :,
                   i * dh: i * dh + sh * (OH - 1) + 1: sh,
                   j * dw: j * dw + sw * (OW - 1) + 1: sw])
    xcol = jnp.stack(cols, axis=2)                   # (B, C, KH*KW, OH, OW)
    xcol = xcol.reshape(B, C * KH * KW, OH * OW)     # c-major then (kh,kw): matches OIHW flatten

    K = C * KH * KW
    P = OH * OW

    # Output-pixel tile: lane-dense multiple of 128; 256-512 fills the 256-wide
    # MXU on v6e/v7x and amortizes the ~0.35us per-grid-step overhead.
    TP = min(512, ((P + 127) // 128) * 128)
    P_pad = ((P + TP - 1) // TP) * TP

    # Reduction (K) tiling: TK multiple of 128 when K is tiled, else the full
    # (un-tiled) K dimension. Keeps VMEM bounded for large layers (v7x: 64 MiB).
    MAX_TK = 1024
    if K <= MAX_TK:
        TK, K_pad = K, K
    else:
        TK = MAX_TK
        K_pad = ((K + TK - 1) // TK) * TK

    xcol = jnp.pad(xcol, ((0, 0), (0, K_pad - K), (0, P_pad - P)))
    w_mat = jnp.pad(w.reshape(OC, K).astype(jnp.bfloat16),
                    ((0, 0), (0, K_pad - K)))
    b2 = (bias if bias is not None
          else jnp.zeros((OC,), jnp.float32)).reshape(OC, 1).astype(jnp.float32)

    out = pl.pallas_call(
        _conv_mm_kernel,
        out_shape=jax.ShapeDtypeStruct((B, OC, P_pad), jnp.float32),
        grid=(B, P_pad // TP, K_pad // TK),
        in_specs=[
            pl.BlockSpec((OC, TK), lambda b, p, k: (0, k)),
            pl.BlockSpec((None, TK, TP), lambda b, p, k: (b, k, p)),
            pl.BlockSpec((OC, 1), lambda b, p, k: (0, 0)),
        ],
        out_specs=pl.BlockSpec((None, OC, TP), lambda b, p, k: (b, 0, p)),
        scratch_shapes=[pltpu.VMEM((OC, TP), jnp.float32)],
        compiler_params=pltpu.CompilerParams(
            dimension_semantics=("parallel", "parallel", "arbitrary")),
    )(w_mat, xcol, b2)

    return out[:, :, :P].reshape(B, OC, OH, OW)


# ---------------------------------------------------------------------------
# Full DOConv2d.forward
# ---------------------------------------------------------------------------
def do_conv2d(x, W, D, d_diag, bias, *, kernel_size, stride, padding,
              dilation, groups):
    M, N = kernel_size
    out_channels, in_per_group, _ = W.shape
    if M * N > 1:
        DoW = compose_dow(W, D, d_diag, out_channels, in_per_group, M, N)
    else:
        DoW = W.reshape(out_channels, in_per_group, M, N)
    return conv2d_pallas(x, DoW, bias, stride, padding, dilation, groups)


if __name__ == "__main__":
    key = jax.random.PRNGKey(0)
    B, Cin, Cout = 2, 4, 8
    H = Wd = 16
    ksize = (3, 3)
    stride = (1, 1)
    padding = (1, 1)
    dilation = (1, 1)
    groups = 1
    M, N = ksize
    MN = M * N
    D_mul = MN  # default: D_mul = M*N

    k1, k2, k3, k4 = jax.random.split(key, 4)
    fan_in = (Cin // groups) * D_mul
    bound = 1.0 / math.sqrt(fan_in)  # kaiming_uniform(a=sqrt(5)) bound
    W = jax.random.uniform(k1, (Cout, Cin // groups, D_mul), jnp.float32, -bound, bound)
    # Module inits D to zeros; use small random values here so the
    # over-parameterized composition path is actually exercised.
    D = 0.1 * jax.random.normal(k2, (Cin, MN, D_mul), dtype=jnp.float32)
    eye = jnp.eye(MN, dtype=jnp.float32).reshape(1, MN, MN)
    d_diag = jnp.tile(eye, (Cin, 1, D_mul // MN))
    bias = jax.random.uniform(k3, (Cout,), jnp.float32, -bound, bound)
    x = jax.random.normal(k4, (B, Cin, H, Wd), dtype=jnp.float32)

    out = do_conv2d(x, W, D, d_diag, bias, kernel_size=ksize, stride=stride,
                    padding=padding, dilation=dilation, groups=groups)
    out = jax.block_until_ready(out)

    # pure-JAX f32 reference of the PyTorch forward
    D_eff = D + d_diag
    W_r = W.reshape(Cout // groups, Cin, D_mul)
    DoW_ref = jnp.einsum('cms,ois->oim', D_eff, W_r).reshape(
        Cout, Cin // groups, M, N)
    ref = jax.lax.conv_general_dilated(
        x, DoW_ref, window_strides=stride,
        padding=[(padding[0], padding[0]), (padding[1], padding[1])],
        rhs_dilation=dilation,
        dimension_numbers=('NCHW', 'OIHW', 'NCHW'),
        feature_group_count=groups) + bias.reshape(1, Cout, 1, 1)

    assert out.shape == (B, Cout, H, Wd), out.shape
    # bf16 matmul operands (f32 accumulation) -> ~2^-9 relative operand
    # rounding; tolerance sized accordingly.
    max_err = float(jnp.max(jnp.abs(out - ref)))
    assert jnp.allclose(out, ref, atol=5e-2, rtol=5e-2), max_err
    print("KERNEL_OK")
</pallas_src>

<mosaic_0001>
module attributes {stable_mosaic.version = 11 : i64} {
  func.func @_compose_kernel(%arg0: memref<32x9xf32, #tpu.memory_space<vmem>>, %arg1: memref<9x9xf32, #tpu.memory_space<vmem>>, %arg2: memref<32x9xf32, #tpu.memory_space<vmem>>) attributes {dimension_semantics = [], scalar_prefetch = 0 : i64, scratch_operands = 0 : i64, tpu.core_type = #tpu.core_type<tc>} {
    %c0 = arith.constant 0 : index
    %c0_0 = arith.constant 0 : index
    %0 = vector.load %arg0[%c0, %c0_0] : memref<32x9xf32, #tpu.memory_space<vmem>>, vector<32x9xf32>
    %c0_1 = arith.constant 0 : index
    %c0_2 = arith.constant 0 : index
    %1 = vector.load %arg1[%c0_1, %c0_2] : memref<9x9xf32, #tpu.memory_space<vmem>>, vector<9x9xf32>
    %cst = arith.constant dense<0.000000e+00> : vector<32x9xf32>
    %2 = tpu.matmul %0, %1, %cst {dimension_numbers = #tpu.dot_dimension_numbers<[1], [0], [0], [1], [0, 0, 1, 1], [], []>} : vector<32x9xf32>, vector<9x9xf32>, vector<32x9xf32> -> vector<32x9xf32>
    %c0_3 = arith.constant 0 : index
    %c0_4 = arith.constant 0 : index
    %3 = vector.load %arg2[%c0_3, %c0_4] : memref<32x9xf32, #tpu.memory_space<vmem>>, vector<32x9xf32>
    tpu.vector_store %arg2[%c0_3, %c0_4], %2 {strides = array<i32>} : memref<32x9xf32, #tpu.memory_space<vmem>>, vector<32x9xf32>,
    return
  }
}

</mosaic_0001>

<llo_original>
// kernel: tpu_custom_call.1
$region0: #{tpu_custom_call.1}
  #allocation0 [shape = 'u32[]', space=smem, size = 0x4, offset = 0x4, fixed_abs, tag = 'smem constant byte address 0x4 - core index']
  #allocation1 [shape = 'u32[144,128]{1,0:T(1,128)}', space=vmem, size = 0x12000, scoped, tag = 'internal scratch']
  %s0 = inlined_call_operand.vmem [shape: f32[32,9], index: 0, kind: input, shape index: {}]
  %s1 = inlined_call_operand.vmem [shape: f32[9,9], index: 1, kind: input, shape index: {}]
  %s2 = inlined_call_operand.vmem [shape: f32[32,9], index: 2, kind: output, shape index: {}]
  %s3 = sld [smem:[#allocation0]]
  $region18: #{tpu_custom_call.1} parent=0
    _
  %s5 = ssub.s32 1, %s3
  %s6 = scalar_select 0, %s5, %s3
  // Predicated region
  $region2: #{tpu_custom_call.1} parent=0 // pred_check
    _
  $region3: #{tpu_custom_call.1} parent=0 // pred_check_branch
    %8 = sbr.rel (0) target = $region5
  $region4: #{tpu_custom_call.1} parent=0 // pred_region
    _
  $region5: #{tpu_custom_call.1} parent=0 // pred_fallthru
    _
  // Predicated region
  $region6: #{tpu_custom_call.1} parent=0 // pred_check
    _
  $region7: #{tpu_custom_call.1} parent=0 // pred_check_branch
    %10 = sbr.rel (0) target = $region9
  $region8: #{tpu_custom_call.1} parent=0 // pred_region
    _
  $region9: #{tpu_custom_call.1} parent=0 // pred_fallthru
    _
  %v11 = vld [vmem:[%s0] sm:$0xff]
  %v12 = vld [vmem:[%s0 + $0x8] sm:$0xff]
  %v13 = vld [vmem:[%s0 + $0x10] sm:$0xff]
  %v14 = vld [vmem:[%s0 + $0x18] sm:$0xff]
  %v15 = vld [vmem:[%s1] sm:$0xff]
  %v16 = vld [vmem:[%s1 + $0x8] sm:$0x1]
  %vm17 = vcmask 72704
  %v19 = vsel %vm17, %v11, 0
  %v22 = vsel %vm17, %v12, 0
  %v25 = vsel %vm17, %v13, 0
  %v28 = vsel %vm17, %v14, 0
  %vm30 = vcmask 1040384
  %v32 = vsel %vm30, %v16, 0
  %34 = vmatprep.subr.mxu0 0.0
  %35 = vmatpush1.msra.mxu0 %v15
  %36 = vmatprep.subr.mxu0 0.0
  %37 = vmatpush1.msra.mxu0 %v32
  %38 = vmatprep.subr.mxu0 0.0
  %39 = vmatpush1.msra.mxu0 0.0
  %40 = vmatprep.subr.mxu0 0.0
  %41 = vmatpush1.msra.mxu0 0.0
  %42 = vmatprep.subr.mxu0 0.0
  %43 = vmatpush1.msra.mxu0 0.0
  %44 = vmatprep.subr.mxu0 0.0
  %45 = vmatpush1.msra.mxu0 0.0
  %46 = vmatprep.subr.mxu0 0.0
  %47 = vmatpush1.msra.mxu0 0.0
  %48 = vmatprep.subr.mxu0 0.0
  %49 = vmatpush1.msra.mxu0 0.0
  %50 = vmatprep.subr.mxu0 0.0
  %51 = vmatpush1.msra.mxu0 0.0
  %52 = vmatprep.subr.mxu0 0.0
  %53 = vmatpush1.msra.mxu0 0.0
  %54 = vmatprep.subr.mxu0 0.0
  %55 = vmatpush1.msra.mxu0 0.0
  %56 = vmatprep.subr.mxu0 0.0
  %57 = vmatpush1.msra.mxu0 0.0
  %58 = vmatprep.subr.mxu0 0.0
  %59 = vmatpush1.msra.mxu0 0.0
  %60 = vmatprep.subr.mxu0 0.0
  %61 = vmatpush1.msra.mxu0 0.0
  %62 = vmatprep.subr.mxu0 0.0
  %63 = vmatpush1.msra.mxu0 0.0
  %64 = vmatprep.subr.mxu0 0.0
  %65 = vmatpush1.msra.mxu0 0.0
  %66 = vmatprep.subr.mxu0 0.0
  %67 = vmatpush1.msra.mxu0 0.0
  %68 = vmatprep.subr.mxu0 0.0
  %69 = vmatpush1.msra.mxu0 0.0
  %70 = vmatprep.subr.mxu0 0.0
  %71 = vmatpush1.msra.mxu0 0.0
  %72 = vmatprep.subr.mxu0 0.0
  %73 = vmatpush1.msra.mxu0 0.0
  %74 = vmatprep.subr.mxu0 0.0
  %75 = vmatpush1.msra.mxu0 0.0
  %76 = vmatprep.subr.mxu0 0.0
  %77 = vmatpush1.msra.mxu0 0.0
  %78 = vmatprep.subr.mxu0 0.0
  %79 = vmatpush1.msra.mxu0 0.0
  %80 = vmatprep.subr.mxu0 0.0
  %81 = vmatpush1.msra.mxu0 0.0
  %82 = vmatprep.subr.mxu0 0.0
  %83 = vmatpush1.msra.mxu0 0.0
  %84 = vmatprep.subr.mxu0 0.0
  %85 = vmatpush1.msra.mxu0 0.0
  %86 = vmatprep.subr.mxu0 0.0
  %87 = vmatpush1.msra.mxu0 0.0
  %88 = vmatprep.subr.mxu0 0.0
  %89 = vmatpush1.msra.mxu0 0.0
  %90 = vmatprep.subr.mxu0 0.0
  %91 = vmatpush1.msra.mxu0 0.0
  %92 = vmatprep.subr.mxu0 0.0
  %93 = vmatpush1.msra.mxu0 0.0
  %94 = vmatprep.subr.mxu0 0.0
  %95 = vmatpush1.msra.mxu0 0.0
  %96 = vmatprep.subr.mxu0 0.0
  %97 = vmatpush1.msra.mxu0 0.0
  %98 = vmatprep.mubr.f32.mxu0 0.0
  %99 = vmatmul.mubr.f32.gmra.mrb[0].mxu0 %v19
  %v100 = vpop.f32.mrb[0].mxu0
  %v101 = vadd.f32 0.0, %v100
  %v102 = vpop.f32.mrb[0].mxu0
  %103 = vmatprep.mubr.f32.mxu0 0.0
  %104 = vmatmul.mubr.f32.gmra.mrb[0].mxu0 %v22
  %v105 = vpop.f32.mrb[0].mxu0
  %v106 = vadd.f32 0.0, %v105
  %v107 = vpop.f32.mrb[0].mxu0
  %108 = vmatprep.mubr.f32.mxu0 0.0
  %109 = vmatmul.mubr.f32.gmra.mrb[0].mxu0 %v25
  %v110 = vpop.f32.mrb[0].mxu0
  %v111 = vadd.f32 0.0, %v110
  %v112 = vpop.f32.mrb[0].mxu0
  %113 = vmatprep.mubr.f32.mxu0 0.0
  %114 = vmatmul.mubr.f32.gmra.mrb[0].mxu0 %v28
  %v115 = vpop.f32.mrb[0].mxu0
  %v116 = vadd.f32 0.0, %v115
  %v117 = vpop.f32.mrb[0].mxu0
  %118 = vdwg.mxu0
  %119 = vst.msk [vmem:[%s2] sm:$0xff] %vm17, %v101
  %120 = vst.msk [vmem:[%s2 + $0x8] sm:$0xff] %vm17, %v106
  %121 = vst.msk [vmem:[%s2 + $0x10] sm:$0xff] %vm17, %v111
  %122 = vst.msk [vmem:[%s2 + $0x18] sm:$0xff] %vm17, %v116
  // Predicated region
  $region10: #{tpu_custom_call.1} parent=0 // pred_check
    _
  $region11: #{tpu_custom_call.1} parent=0 // pred_check_branch
    %124 = sbr.rel (0) target = $region13
  $region12: #{tpu_custom_call.1} parent=0 // pred_region
    _
  $region13: #{tpu_custom_call.1} parent=0 // pred_fallthru
    _
  // Predicated region
  $region14: #{tpu_custom_call.1} parent=0 // pred_check
    _
  $region15: #{tpu_custom_call.1} parent=0 // pred_check_branch
    %126 = sbr.rel (0) target = $region17
  $region16: #{tpu_custom_call.1} parent=0 // pred_region
    _
  $region17: #{tpu_custom_call.1} parent=0 // pred_fallthru
    _

</llo_original>
